<compile_context>
chip_gen: v7x
topology: tpu7x:2x2x1
jax: 0.10.0
libtpu: 0.0.40
codegen_flags: <defaults>
</compile_context>

<pallas_src>
import math

import jax
import jax.numpy as jnp
from jax.experimental import pallas as pl
from jax.experimental.pallas import tpu as pltpu


def _copy_kernel(x_ref, o_ref):
    # Pure element-stream copy (the only "work" a view could ever need).
    o_ref[...] = x_ref[...]


def _resolve_shape(total, shape):
    """torch-style shape resolution (single -1 allowed)."""
    shape = tuple(int(s) for s in shape)
    neg = [i for i, s in enumerate(shape) if s == -1]
    if len(neg) > 1:
        raise ValueError("view(): only one dimension may be -1")
    if neg:
        known = math.prod(s for s in shape if s != -1)
        if known == 0 or total % known != 0:
            raise ValueError(f"view shape {shape} incompatible with {total} elements")
        shape = tuple(total // known if s == -1 else s for s in shape)
    if math.prod(shape) != total:
        raise ValueError(f"view shape {shape} incompatible with {total} elements")
    return shape


def _pick_block_config(row_bytes):
    """Pick (block_bytes, vmem_limit_bytes) sized to the chip's VMEM.

    in + out, double-buffered => ~4x block_bytes resident in VMEM.
      v7x  (64 MiB VMEM):  4 MiB blocks, default scoped limit.
      v5e/v6e (128 MiB):    8 MiB blocks, raise scoped limit to 64 MiB.
    Falls back to the conservative 4 MiB choice if the query fails.
    """
    block_bytes = 4 * 1024 * 1024
    vmem_limit = None
    try:
        vmem = pltpu.get_tpu_info().vmem_capacity_bytes
        if vmem >= (96 << 20):  # v5e / v6e
            block_bytes = 8 * 1024 * 1024
            vmem_limit = 64 * 1024 * 1024
    except Exception:
        pass
    # Never pick a block smaller than one (8, lanes) tile.
    block_bytes = max(block_bytes, 8 * row_bytes)
    return block_bytes, vmem_limit


def _view_copy_kernel(x, out_shape):
    """Explicit Pallas copy of the contiguous element stream (benchmark path)."""
    total = x.size
    itemsize = jnp.dtype(x.dtype).itemsize

    # Widest lane-dense slab (multiple of 128) that divides the element count.
    lanes = None
    for w in (2048, 1024, 512, 256, 128):
        if total % w == 0:
            lanes = w
            break
    if lanes is None:
        # Ragged element count (< multiple of 128): padding would cost extra
        # full-tensor HBM traffic, and a view is metadata-only anyway.
        return jnp.reshape(x, out_shape)

    rows = total // lanes
    slab = x.reshape(rows, lanes)  # row-major == torch contiguous order

    block_bytes, vmem_limit = _pick_block_config(lanes * itemsize)
    tile_rows = min(rows, max(8, block_bytes // (lanes * itemsize)))
    if tile_rows < rows:
        # Keep the block (8, 128)-aligned; the last (partial) block, if any,
        # is clipped automatically by Pallas.
        tile_rows = max(8, (tile_rows // 8) * 8)

    grid = (pl.cdiv(rows, tile_rows),)

    params = {"dimension_semantics": ("parallel",)}
    if vmem_limit is not None:
        params["vmem_limit_bytes"] = vmem_limit

    out_slab = pl.pallas_call(
        _copy_kernel,
        out_shape=jax.ShapeDtypeStruct((rows, lanes), x.dtype),
        grid_spec=pltpu.PrefetchScalarGridSpec(
            num_scalar_prefetch=0,
            grid=grid,
            in_specs=[pl.BlockSpec((tile_rows, lanes), lambda i: (i, 0))],
            out_specs=pl.BlockSpec((tile_rows, lanes), lambda i: (i, 0)),
        ),
        compiler_params=pltpu.CompilerParams(**params),
        # NOTE: input_output_aliases={0: 0} would let the copy reuse the input
        # HBM buffer, but since the slab aliases the caller's `x` (reshape is a
        # bitcast) XLA would have to insert a defensive copy — net negative.
    )(slab)

    return out_slab.reshape(out_shape)


def pallas_view(x, shape, *, force_kernel=False):
    """Equivalent of torch.Tensor.view(*shape) for a contiguous tensor."""
    out_shape = _resolve_shape(x.size, shape)
    if not force_kernel:
        # A view is metadata-only; row-major reshape is zero-copy in XLA.
        return jnp.reshape(x, out_shape)
    return _view_copy_kernel(x, out_shape)


class View:
    """Thin module-style wrapper mirroring the PyTorch spec."""

    def __init__(self, shape):
        self.shape = tuple(shape)

    def __call__(self, x, *, force_kernel=False):
        return pallas_view(x, self.shape, force_kernel=force_kernel)


if __name__ == "__main__":
    key = jax.random.PRNGKey(0)
    # Small NCHW-style input: (batch=2, channels=4, H=16, W=16) -> 2048 elems.
    x = jax.random.normal(key, (2, 4, 16, 16), dtype=jnp.float32)

    view = View((-1, 256))

    # Pallas kernel path (explicit element-stream copy on TPU).
    y_kernel = jax.block_until_ready(view(x, force_kernel=True))
    # Default path (metadata-only reshape — the recommended production path).
    y_fast = jax.block_until_ready(view(x))

    # Reference: torch's view on a contiguous tensor == row-major reshape.
    y_ref = x.reshape(8, 256)
    assert y_kernel.shape == (8, 256), y_kernel.shape
    assert y_kernel.dtype == x.dtype
    assert bool(jnp.array_equal(y_kernel, y_ref)), "kernel view output mismatch"
    assert y_fast.shape == (8, 256)
    assert bool(jnp.array_equal(y_fast, y_ref)), "fast view output mismatch"

    print("KERNEL_OK")
</pallas_src>

<mosaic_0001>
module attributes {stable_mosaic.version = 11 : i64} {
  func.func @_copy_kernel(%arg0: i32, %arg1: memref<1x2048xf32, #tpu.memory_space<vmem>>, %arg2: memref<1x2048xf32, #tpu.memory_space<vmem>>) attributes {dimension_semantics = [#tpu.dimension_semantics<parallel>], iteration_bounds = array<i64: 1>, scalar_prefetch = 0 : i64, scratch_operands = 0 : i64, tpu.core_type = #tpu.core_type<tc>, window_params = [{transform_indices = @transform_0, window_bounds = array<i64: 1, 2048>}, {transform_indices = @transform_1, window_bounds = array<i64: 1, 2048>}]} {
    %c0 = arith.constant 0 : index
    %c0_0 = arith.constant 0 : index
    %0 = vector.load %arg1[%c0, %c0_0] : memref<1x2048xf32, #tpu.memory_space<vmem>>, vector<1x2048xf32>
    %c0_1 = arith.constant 0 : index
    %c0_2 = arith.constant 0 : index
    %1 = vector.load %arg2[%c0_1, %c0_2] : memref<1x2048xf32, #tpu.memory_space<vmem>>, vector<1x2048xf32>
    tpu.vector_store %arg2[%c0_1, %c0_2], %0 {strides = array<i32>} : memref<1x2048xf32, #tpu.memory_space<vmem>>, vector<1x2048xf32>,
    return
  }
  func.func @transform_0(%arg0: i32) -> (i32, i32) {
    %c0_i32 = arith.constant 0 : i32
    %c0_i32_0 = arith.constant 0 : i32
    return %arg0, %c0_i32 : i32, i32
  }
  func.func @transform_1(%arg0: i32) -> (i32, i32) {
    %c0_i32 = arith.constant 0 : i32
    %c0_i32_0 = arith.constant 0 : i32
    return %arg0, %c0_i32 : i32, i32
  }
}

</mosaic_0001>

<llo_original>
// kernel: tpu_custom_call.1
$region0: #{tpu_custom_call.1}
  #allocation0 [shape = 'u32[]', space=smem, size = 0x4, offset = 0x4, fixed_abs, tag = 'smem constant byte address 0x4 - core index']
  #allocation1 [shape = 'u32[144,128]{1,0:T(1,128)}', space=vmem, size = 0x12000, scoped, tag = 'internal scratch']
  %s0 = inlined_call_operand.hbm [shape: f32[1,2048], index: 0, kind: input, shape index: {}]
  %s1 = inlined_call_operand.hbm [shape: f32[1,2048], index: 1, kind: output, shape index: {}]
  %s2 = sld [smem:[#allocation0]]
  $region18: #{tpu_custom_call.1} parent=0
    _
  %s4 = ssub.s32 1, %s2
  %s5 = scalar_select 0, %s4, %s2
  $region1: #{tpu_custom_call.1} parent=0
    #allocation2 [shape = 'u8[8192]{0}', space=vmem, size = 0x2000, scoped, tag = 'input window, operand 0, single buffered']
    #allocation3 [shape = 's32[1]{0}', space=sflag, size = 0x4, scoped, tag = 'scoped memory for tpu_custom_call.1']
    #allocation4 [shape = 's32[1]{0}', space=sflag, size = 0x4, scoped, tag = 'scoped memory for tpu_custom_call.1']
    #allocation5 [shape = 'u8[8192]{0}', space=vmem, size = 0x2000, scoped, tag = 'output window, operand 0, single buffered']
    %6 = vsyncpa [#allocation3], 0
    %7 = vsyncpa [#allocation4], 0
    // Predicated region
    $region2: #{tpu_custom_call.1} parent=1 // pred_check
      _
    $region3: #{tpu_custom_call.1} parent=1 // pred_check_branch
      %9 = sbr.rel (0) target = $region5
    $region4: #{tpu_custom_call.1} parent=1 // pred_region
      %s11 = ssub.s32 256, 256
      %12 = vsyncadd [#allocation3], %s11
      %s14 = sshll.u32 [#allocation2], 4
      %s15 = int_to_ptr.vmem [resolvable:$true] %s14
      %17 = dma.hbm_to_vmem [thread:$0]  %s0, 256, %s15, [#allocation3]
    $region5: #{tpu_custom_call.1} parent=1 // pred_fallthru
      _
    // Predicated region
    $region6: #{tpu_custom_call.1} parent=1 // pred_check
      _
    $region7: #{tpu_custom_call.1} parent=1 // pred_check_branch
      %19 = sbr.rel (0) target = $region9
    $region8: #{tpu_custom_call.1} parent=1 // pred_region
      %20 = dma.done [#allocation3], 256
    $region9: #{tpu_custom_call.1} parent=1 // pred_fallthru
      _
    %v21 = vld [vmem:[#allocation2] sm:$0xff]
    %v22 = vld [vmem:[#allocation2 + $0x8] sm:$0xff]
    %23 = vst [vmem:[#allocation5] sm:$0xff] %v21
    %24 = vst [vmem:[#allocation5 + $0x8] sm:$0xff] %v22
    // Predicated region
    $region10: #{tpu_custom_call.1} parent=1 // pred_check
      _
    $region11: #{tpu_custom_call.1} parent=1 // pred_check_branch
      %26 = sbr.rel (0) target = $region13
    $region12: #{tpu_custom_call.1} parent=1 // pred_region
      %s28 = ssub.s32 256, 256
      %29 = vsyncadd [#allocation4], %s28
      %s31 = sshll.u32 [#allocation5], 4
      %s32 = int_to_ptr.vmem [resolvable:$true] %s31
      %34 = dma.vmem_to_hbm [thread:$0]  %s32, 256, %s1, [#allocation4]
    $region13: #{tpu_custom_call.1} parent=1 // pred_fallthru
      _
    // Predicated region
    $region14: #{tpu_custom_call.1} parent=1 // pred_check
      _
    $region15: #{tpu_custom_call.1} parent=1 // pred_check_branch
      %36 = sbr.rel (0) target = $region17
    $region16: #{tpu_custom_call.1} parent=1 // pred_region
      %37 = dma.done [#allocation4], 256
    $region17: #{tpu_custom_call.1} parent=1 // pred_fallthru
      _
    %38 = vsyncpa [#allocation3], 1
    %39 = vsyncpa [#allocation4], 1

</llo_original>
